<compile_context>
chip_gen: v7x
topology: tpu7x:2x2x1
jax: 0.10.0
libtpu: 0.0.40
codegen_flags: <defaults>
</compile_context>

<pallas_src>
import functools

import jax
import jax.numpy as jnp
from jax.experimental import pallas as pl
from jax.experimental.pallas import tpu as pltpu


def _se_kernel(x_ref, w1t_ref, w2t_ref, o_ref, acc_ref,
               *, inv_hw, hw, thw, needs_mask):
    # x_ref  : (TB, C, THW) f32   streaming spatial tile
    # w1t_ref: (C, HID)     f32   fc1 weight, pre-transposed
    # w2t_ref: (HID, OUT)   f32   fc2 weight, pre-transposed
    # o_ref  : (TB, OUT)    f32
    # acc_ref: (TB, C)      f32   running spatial sum (VMEM scratch)
    j = pl.program_id(1)

    @pl.when(j == 0)
    def _init():
        acc_ref[...] = jnp.zeros_like(acc_ref)

    x = x_ref[...]                                       # (TB, C, THW)
    if needs_mask:
        # Zero out lanes past the true H*W extent (only the last tile has any).
        lane = jax.lax.broadcasted_iota(jnp.int32, x.shape, dimension=2)
        x = jnp.where(j * thw + lane < hw, x, 0.0)

    # Raw partial sum; divide once at the end (cheaper than per-tile mean).
    acc_ref[...] += jnp.sum(x, axis=-1)                  # (TB, C)

    @pl.when(j == pl.num_programs(1) - 1)
    def _finalize():
        y = acc_ref[...] * inv_hw                        # global average pool
        h = jnp.dot(y, w1t_ref[...], preferred_element_type=jnp.float32)
        h = jnp.maximum(h, 0.0)                          # (TB, HID)
        logits = jnp.dot(h, w2t_ref[...], preferred_element_type=jnp.float32)

        # Softmax along the output-channel axis (nn.Softmax() on 2D -> dim=1).
        m = jnp.max(logits, axis=-1, keepdims=True)
        e = jnp.exp(logits - m)
        probs = e * pl.reciprocal(jnp.sum(e, axis=-1, keepdims=True),
                                  approx=False)
        o_ref[...] = probs.astype(o_ref.dtype)


def se_layer(x, w1, w2, *, per_buffer_bytes=8 * 1024 * 1024):
    """x: (B, C, H, W) f32; w1: (C//r, C); w2: (O, C//r).  Returns (B, O, 1, 1)."""
    b, c, h, w = x.shape
    hid, c_in = w1.shape
    out_ch, hid2 = w2.shape
    assert c_in == c and hid2 == hid

    hw = h * w
    x_flat = x.reshape(b, c, hw)

    # ---- batch tiling (rows of the pooled matrix) ----
    if b > 8 and b % 8 == 0:
        tb = 8                      # second-to-last dim of out block: mult of 8
    else:
        tb = b                      # full dim -> no (8,128) constraint
    nb = b // tb

    # ---- spatial tiling: lane-dense, sized to the VMEM budget ----
    if hw <= 128:
        thw = hw                    # full (last) dim is always legal
    else:
        max_thw = max(128, (per_buffer_bytes // (tb * c * 4)) // 128 * 128)
        hw_floor = max(128, (hw // 128) * 128)
        thw = min(max_thw, hw_floor, 2048)
    n_hw = pl.cdiv(hw, thw)
    needs_mask = (hw % thw) != 0

    # Pre-transpose weights in the wrapper (free layout plumbing; keeps the
    # in-kernel MXU feed clean).
    w1t = jnp.asarray(w1).T         # (C, HID)
    w2t = jnp.asarray(w2).T         # (HID, OUT)

    kernel = functools.partial(
        _se_kernel, inv_hw=1.0 / hw, hw=hw, thw=thw, needs_mask=needs_mask)

    block_bytes = tb * c * thw * 4
    vmem_limit = max(2 * block_bytes + (8 << 20), 24 << 20)   # <=32 MiB: v7x-safe

    out = pl.pallas_call(
        kernel,
        out_shape=jax.ShapeDtypeStruct((b, out_ch), jnp.float32),
        grid_spec=pltpu.PrefetchScalarGridSpec(
            num_scalar_prefetch=0,
            grid=(nb, n_hw),
            in_specs=[
                pl.BlockSpec((tb, c, thw), lambda i, j: (i, 0, j)),
                pl.BlockSpec((c, hid), lambda i, j: (0, 0)),      # resident
                pl.BlockSpec((hid, out_ch), lambda i, j: (0, 0)),  # resident
            ],
            out_specs=pl.BlockSpec((tb, out_ch), lambda i, j: (i, 0)),
            scratch_shapes=[pltpu.VMEM((tb, c), jnp.float32)],
        ),
        compiler_params=pltpu.CompilerParams(
            dimension_semantics=("parallel", "arbitrary"),
            vmem_limit_bytes=vmem_limit,
        ),
    )(x_flat, w1t, w2t)

    return out.reshape(b, out_ch, 1, 1)


def _reference(x, w1, w2):
    y = jnp.mean(x, axis=(2, 3))                     # (B, C)
    h = jnp.maximum(y @ w1.T, 0.0)
    logits = h @ w2.T
    return jax.nn.softmax(logits, axis=-1).reshape(x.shape[0], -1, 1, 1)


if __name__ == "__main__":
    # Small shapes consistent with the module: in_channel=64, reduction=16,
    # output_channel=2  ->  hidden = 4.
    B, C = 2, 64
    REDUCTION, OUT_CH = 16, 2
    HID = C // REDUCTION

    key = jax.random.PRNGKey(0)
    kx, k1, k2, kx2 = jax.random.split(key, 4)

    # Deterministic init mimicking c2_xavier_fill (kaiming_uniform, a=1):
    # bound = sqrt(3 / fan_in), uniform(-bound, bound).
    bound1 = (3.0 / C) ** 0.5
    bound2 = (3.0 / HID) ** 0.5
    w1 = jax.random.uniform(k1, (HID, C), jnp.float32, -bound1, bound1)
    w2 = jax.random.uniform(k2, (OUT_CH, HID), jnp.float32, -bound2, bound2)

    # 1) Main shape: H=W=16 -> HW=256 (single spatial tile).
    x = jax.random.normal(kx, (B, C, 16, 16), dtype=jnp.float32)
    out = jax.block_until_ready(se_layer(x, w1, w2))
    ref = _reference(x, w1, w2)
    assert out.shape == (B, OUT_CH, 1, 1), out.shape
    assert jnp.allclose(out, ref, atol=1e-5, rtol=1e-5), (out, ref)

    # 2) Same input with a tiny VMEM budget to force multi-tile spatial
    #    streaming (2 full 128-lane tiles, accumulator path, no mask).
    out2 = jax.block_until_ready(se_layer(x, w1, w2, per_buffer_bytes=1 << 16))
    assert jnp.allclose(out2, ref, atol=1e-5, rtol=1e-5), (out2, ref)

    # 3) Non-multiple-of-128 spatial extent (H=W=14 -> HW=196): exercises the
    #    masked partial last tile.
    x3 = jax.random.normal(kx2, (B, C, 14, 14), dtype=jnp.float32)
    out3 = jax.block_until_ready(se_layer(x3, w1, w2))
    ref3 = _reference(x3, w1, w2)
    assert jnp.allclose(out3, ref3, atol=1e-5, rtol=1e-5), (out3, ref3)

    print("KERNEL_OK")
</pallas_src>

<mosaic_0001>
module attributes {stable_mosaic.version = 11 : i64} {
  func.func @_se_kernel(%arg0: i32, %arg1: i32, %arg2: memref<2x64x256xf32, #tpu.memory_space<vmem>>, %arg3: memref<64x4xf32, #tpu.memory_space<vmem>>, %arg4: memref<4x2xf32, #tpu.memory_space<vmem>>, %arg5: memref<2x2xf32, #tpu.memory_space<vmem>>, %arg6: memref<2x64xf32, #tpu.memory_space<vmem>>) attributes {dimension_semantics = [#tpu.dimension_semantics<parallel>, #tpu.dimension_semantics<arbitrary>], iteration_bounds = array<i64: 1, 1>, scalar_prefetch = 0 : i64, scratch_operands = 1 : i64, tpu.core_type = #tpu.core_type<tc>, window_params = [{transform_indices = @transform_0, window_bounds = array<i64: 2, 64, 256>}, {pipeline_mode = #tpu.pipeline_mode<synchronous>, transform_indices = @transform_1, window_bounds = array<i64: 64, 4>}, {pipeline_mode = #tpu.pipeline_mode<synchronous>, transform_indices = @transform_2, window_bounds = array<i64: 4, 2>}, {transform_indices = @transform_3, window_bounds = array<i64: 2, 2>}]} {
    %c0_i32 = arith.constant 0 : i32
    %0 = arith.cmpi eq, %arg1, %c0_i32 : i32
    %1 = arith.extui %0 : i1 to i32
    %c0_i32_0 = arith.constant 0 : i32
    %2 = arith.cmpi ne, %1, %c0_i32_0 : i32
    scf.if %2 {
      %cst_9 = arith.constant 0.000000e+00 : f32
      %11 = vector.broadcast %cst_9 : f32 to vector<2x64xf32>
      %c0_10 = arith.constant 0 : index
      %c0_11 = arith.constant 0 : index
      %12 = vector.load %arg6[%c0_10, %c0_11] : memref<2x64xf32, #tpu.memory_space<vmem>>, vector<2x64xf32>
      tpu.vector_store %arg6[%c0_10, %c0_11], %11 {strides = array<i32>} : memref<2x64xf32, #tpu.memory_space<vmem>>, vector<2x64xf32>,
    } else {
    }
    %c0 = arith.constant 0 : index
    %c0_1 = arith.constant 0 : index
    %c0_2 = arith.constant 0 : index
    %3 = vector.load %arg2[%c0, %c0_1, %c0_2] : memref<2x64x256xf32, #tpu.memory_space<vmem>>, vector<2x64x256xf32>
    %c0_3 = arith.constant 0 : index
    %c0_4 = arith.constant 0 : index
    %4 = vector.load %arg6[%c0_3, %c0_4] : memref<2x64xf32, #tpu.memory_space<vmem>>, vector<2x64xf32>
    %cst = arith.constant dense<0.000000e+00> : vector<2x64xf32>
    %5 = vector.multi_reduction <add>, %3, %cst [2] : vector<2x64x256xf32> to vector<2x64xf32>
    %6 = arith.addf %4, %5 : vector<2x64xf32>
    %c0_5 = arith.constant 0 : index
    %c0_6 = arith.constant 0 : index
    %7 = vector.load %arg6[%c0_5, %c0_6] : memref<2x64xf32, #tpu.memory_space<vmem>>, vector<2x64xf32>
    tpu.vector_store %arg6[%c0_5, %c0_6], %6 {strides = array<i32>} : memref<2x64xf32, #tpu.memory_space<vmem>>, vector<2x64xf32>,
    %c0_i32_7 = arith.constant 0 : i32
    %8 = arith.cmpi eq, %arg1, %c0_i32_7 : i32
    %9 = arith.extui %8 : i1 to i32
    %c0_i32_8 = arith.constant 0 : i32
    %10 = arith.cmpi ne, %9, %c0_i32_8 : i32
    scf.if %10 {
      %c0_9 = arith.constant 0 : index
      %c0_10 = arith.constant 0 : index
      %11 = vector.load %arg6[%c0_9, %c0_10] : memref<2x64xf32, #tpu.memory_space<vmem>>, vector<2x64xf32>
      %cst_11 = arith.constant 3.906250e-03 : f32
      %12 = vector.broadcast %cst_11 : f32 to vector<2x64xf32>
      %13 = arith.mulf %11, %12 : vector<2x64xf32>
      %c0_12 = arith.constant 0 : index
      %c0_13 = arith.constant 0 : index
      %14 = vector.load %arg3[%c0_12, %c0_13] : memref<64x4xf32, #tpu.memory_space<vmem>>, vector<64x4xf32>
      %cst_14 = arith.constant dense<0.000000e+00> : vector<2x4xf32>
      %15 = tpu.matmul %13, %14, %cst_14 {dimension_numbers = #tpu.dot_dimension_numbers<[1], [0], [0], [1], [0, 0, 1, 1], [], []>} : vector<2x64xf32>, vector<64x4xf32>, vector<2x4xf32> -> vector<2x4xf32>
      %cst_15 = arith.constant 0.000000e+00 : f32
      %16 = vector.broadcast %cst_15 : f32 to vector<2x4xf32>
      %17 = arith.maximumf %15, %16 : vector<2x4xf32>
      %c0_16 = arith.constant 0 : index
      %c0_17 = arith.constant 0 : index
      %18 = vector.load %arg4[%c0_16, %c0_17] : memref<4x2xf32, #tpu.memory_space<vmem>>, vector<4x2xf32>
      %cst_18 = arith.constant dense<0.000000e+00> : vector<2x2xf32>
      %19 = tpu.matmul %17, %18, %cst_18 {dimension_numbers = #tpu.dot_dimension_numbers<[1], [0], [0], [1], [0, 0, 1, 1], [], []>} : vector<2x4xf32>, vector<4x2xf32>, vector<2x2xf32> -> vector<2x2xf32>
      %cst_19 = arith.constant dense<0xFF800000> : vector<2xf32>
      %20 = vector.multi_reduction <maximumf>, %19, %cst_19 [1] : vector<2x2xf32> to vector<2xf32>
      %21 = vector.shape_cast %20 : vector<2xf32> to vector<2x1xf32>
      %22 = vector.broadcast %21 : vector<2x1xf32> to vector<2x2xf32>
      %23 = arith.subf %19, %22 : vector<2x2xf32>
      %24 = math.exp %23 : vector<2x2xf32>
      %cst_20 = arith.constant dense<0.000000e+00> : vector<2xf32>
      %25 = vector.multi_reduction <add>, %24, %cst_20 [1] : vector<2x2xf32> to vector<2xf32>
      %26 = vector.shape_cast %25 : vector<2xf32> to vector<2x1xf32>
      %27 = tpu.reciprocal %26 : vector<2x1xf32> -> vector<2x1xf32>
      %28 = vector.broadcast %27 : vector<2x1xf32> to vector<2x2xf32>
      %29 = arith.mulf %24, %28 : vector<2x2xf32>
      %c0_21 = arith.constant 0 : index
      %c0_22 = arith.constant 0 : index
      %30 = vector.load %arg5[%c0_21, %c0_22] : memref<2x2xf32, #tpu.memory_space<vmem>>, vector<2x2xf32>
      tpu.vector_store %arg5[%c0_21, %c0_22], %29 {strides = array<i32>} : memref<2x2xf32, #tpu.memory_space<vmem>>, vector<2x2xf32>,
    } else {
    }
    return
  }
  func.func @transform_0(%arg0: i32, %arg1: i32) -> (i32, i32, i32) {
    %c0_i32 = arith.constant 0 : i32
    %c0_i32_0 = arith.constant 0 : i32
    return %arg0, %c0_i32, %arg1 : i32, i32, i32
  }
  func.func @transform_1(%arg0: i32, %arg1: i32) -> (i32, i32) {
    %c0_i32 = arith.constant 0 : i32
    %c0_i32_0 = arith.constant 0 : i32
    %c0_i32_1 = arith.constant 0 : i32
    return %c0_i32, %c0_i32_0 : i32, i32
  }
  func.func @transform_2(%arg0: i32, %arg1: i32) -> (i32, i32) {
    %c0_i32 = arith.constant 0 : i32
    %c0_i32_0 = arith.constant 0 : i32
    %c0_i32_1 = arith.constant 0 : i32
    return %c0_i32, %c0_i32_0 : i32, i32
  }
  func.func @transform_3(%arg0: i32, %arg1: i32) -> (i32, i32) {
    %c0_i32 = arith.constant 0 : i32
    %c0_i32_0 = arith.constant 0 : i32
    return %arg0, %c0_i32 : i32, i32
  }
}

</mosaic_0001>

<llo_original>
// kernel: tpu_custom_call.1
$region0: #{tpu_custom_call.1}
  #allocation0 [shape = 'u32[]', space=smem, size = 0x4, offset = 0x4, fixed_abs, tag = 'smem constant byte address 0x4 - core index']
  #allocation1 [shape = 'u32[144,128]{1,0:T(1,128)}', space=vmem, size = 0x12000, scoped, tag = 'internal scratch']
  #allocation2 [shape = 'f32[2,64]{1,0:T(2,128)}', space=vmem, size = 0x400, scoped, tag = 'scratch operand']
  %s0 = inlined_call_operand.hbm [shape: f32[2,64,256], index: 0, kind: input, shape index: {}]
  %s1 = inlined_call_operand.vmem [shape: f32[64,4], index: 1, kind: input, shape index: {}]
  %s2 = inlined_call_operand.vmem [shape: f32[4,2], index: 2, kind: input, shape index: {}]
  %s3 = inlined_call_operand.hbm [shape: f32[2,2], index: 3, kind: output, shape index: {}]
  %s4 = sld [smem:[#allocation0]]
  $region34: #{tpu_custom_call.1} parent=0
    _
  %s6 = ssub.s32 1, %s4
  %s7 = scalar_select 0, %s6, %s4
  $region1: #{tpu_custom_call.1} parent=0
    #allocation3 [shape = 'u8[131072]{0}', space=vmem, size = 0x20000, scoped, tag = 'input window, operand 0, single buffered']
    #allocation4 [shape = 's32[1]{0}', space=sflag, size = 0x4, scoped, tag = 'scoped memory for tpu_custom_call.1']
    #allocation5 [shape = 's32[1]{0}', space=sflag, size = 0x4, scoped, tag = 'scoped memory for tpu_custom_call.1']
    #allocation6 [shape = 'u8[1024]{0}', space=vmem, size = 0x400, scoped, tag = 'output window, operand 0, single buffered']
    %8 = vsyncpa [#allocation4], 0
    %9 = vsyncpa [#allocation5], 0
    // Predicated region
    $region2: #{tpu_custom_call.1} parent=1 // pred_check
      _
    $region3: #{tpu_custom_call.1} parent=1 // pred_check_branch
      %11 = sbr.rel (0) target = $region5
    $region4: #{tpu_custom_call.1} parent=1 // pred_region
      %s13 = ssub.s32 4096, 4096
      %14 = vsyncadd [#allocation4], %s13
      %s15 = sshll.u32 [#allocation3], 4
      %s16 = int_to_ptr.vmem [resolvable:$true] %s15
      %21 = dma.hbm_to_vmem [thread:$0]  %s0, 4096, %s16, [#allocation4], 256, 256, 16
    $region5: #{tpu_custom_call.1} parent=1 // pred_fallthru
      _
    // Predicated region
    $region6: #{tpu_custom_call.1} parent=1 // pred_check
      _
    $region7: #{tpu_custom_call.1} parent=1 // pred_check_branch
      %23 = sbr.rel (0) target = $region9
    $region8: #{tpu_custom_call.1} parent=1 // pred_region
      _
    $region9: #{tpu_custom_call.1} parent=1 // pred_fallthru
      _
    // Predicated region
    $region10: #{tpu_custom_call.1} parent=1 // pred_check
      _
    $region11: #{tpu_custom_call.1} parent=1 // pred_check_branch
      %25 = sbr.rel (0) target = $region13
    $region12: #{tpu_custom_call.1} parent=1 // pred_region
      _
    $region13: #{tpu_custom_call.1} parent=1 // pred_fallthru
      _
    // Predicated region
    $region14: #{tpu_custom_call.1} parent=1 // pred_check
      _
    $region15: #{tpu_custom_call.1} parent=1 // pred_check_branch
      %27 = sbr.rel (0) target = $region17
    $region16: #{tpu_custom_call.1} parent=1 // pred_region
      %28 = dma.done [#allocation4], 4096
    $region17: #{tpu_custom_call.1} parent=1 // pred_fallthru
      _
    %p29 = scmp.eq.s32.totalorder 0, 0
    // Predicated region
    $region18: #{tpu_custom_call.1} parent=1 // pred_check
      %p30 = pneg %p29
    $region19: #{tpu_custom_call.1} parent=1 // pred_check_branch
      %32 = sbr.rel (%p30) target = $region21
    $region20: #{tpu_custom_call.1} parent=1 // pred_region
      %vm33 = vcmask 517120
      %34 = vst.msk [vmem:[#allocation2] sm:$0x3] %vm33, 0.0
    $region21: #{tpu_custom_call.1} parent=1 // pred_fallthru
      _
    %v35 = vld [vmem:[#allocation3] sm:$0xff]
    %v36 = vld [vmem:[#allocation3 + $0x8] sm:$0xff]
    %v37 = vld [vmem:[#allocation3 + $0x10] sm:$0xff]
    %v38 = vld [vmem:[#allocation3 + $0x18] sm:$0xff]
    %v39 = vld [vmem:[#allocation3 + $0x20] sm:$0xff]
    %v40 = vld [vmem:[#allocation3 + $0x28] sm:$0xff]
    %v41 = vld [vmem:[#allocation3 + $0x30] sm:$0xff]
    %v42 = vld [vmem:[#allocation3 + $0x38] sm:$0xff]
    %v43 = vld [vmem:[#allocation3 + $0x40] sm:$0xff]
    %v44 = vld [vmem:[#allocation3 + $0x48] sm:$0xff]
    %v45 = vld [vmem:[#allocation3 + $0x50] sm:$0xff]
    %v46 = vld [vmem:[#allocation3 + $0x58] sm:$0xff]
    %v47 = vld [vmem:[#allocation3 + $0x60] sm:$0xff]
    %v48 = vld [vmem:[#allocation3 + $0x68] sm:$0xff]
    %v49 = vld [vmem:[#allocation3 + $0x70] sm:$0xff]
    %v50 = vld [vmem:[#allocation3 + $0x78] sm:$0xff]
    %v51 = vld [vmem:[#allocation3 + $0x80] sm:$0xff]
    %v52 = vld [vmem:[#allocation3 + $0x88] sm:$0xff]
    %v53 = vld [vmem:[#allocation3 + $0x90] sm:$0xff]
    %v54 = vld [vmem:[#allocation3 + $0x98] sm:$0xff]
    %v55 = vld [vmem:[#allocation3 + $0xa0] sm:$0xff]
    %v56 = vld [vmem:[#allocation3 + $0xa8] sm:$0xff]
    %v57 = vld [vmem:[#allocation3 + $0xb0] sm:$0xff]
    %v58 = vld [vmem:[#allocation3 + $0xb8] sm:$0xff]
    %v59 = vld [vmem:[#allocation3 + $0xc0] sm:$0xff]
    %v60 = vld [vmem:[#allocation3 + $0xc8] sm:$0xff]
    %v61 = vld [vmem:[#allocation3 + $0xd0] sm:$0xff]
    %v62 = vld [vmem:[#allocation3 + $0xd8] sm:$0xff]
    %v63 = vld [vmem:[#allocation3 + $0xe0] sm:$0xff]
    %v64 = vld [vmem:[#allocation3 + $0xe8] sm:$0xff]
    %v65 = vld [vmem:[#allocation3 + $0xf0] sm:$0xff]
    %v66 = vld [vmem:[#allocation3 + $0xf8] sm:$0xff]
    %v67 = vld [vmem:[#allocation2] sm:$0x3]
    %v68 = vadd.f32 %v35, %v36
    %69 = vadd.xlane.f32.xlu0 %v68
    %v70 = vpop.xlane.xlu0 %69
    %v71 = vadd.f32 %v37, %v38
    %72 = vadd.xlane.f32.xlu0 %v71
    %v73 = vpop.xlane.xlu0 %72
    %v74 = vadd.f32 %v39, %v40
    %75 = vadd.xlane.f32.xlu0 %v74
    %v76 = vpop.xlane.xlu0 %75
    %v77 = vadd.f32 %v41, %v42
    %78 = vadd.xlane.f32.xlu0 %v77
    %v79 = vpop.xlane.xlu0 %78
    %v80 = vadd.f32 %v43, %v44
    %81 = vadd.xlane.f32.xlu0 %v80
    %v82 = vpop.xlane.xlu0 %81
    %v83 = vadd.f32 %v45, %v46
    %84 = vadd.xlane.f32.xlu0 %v83
    %v85 = vpop.xlane.xlu0 %84
    %v86 = vadd.f32 %v47, %v48
    %87 = vadd.xlane.f32.xlu0 %v86
    %v88 = vpop.xlane.xlu0 %87
    %v89 = vadd.f32 %v49, %v50
    %90 = vadd.xlane.f32.xlu0 %v89
    %v91 = vpop.xlane.xlu0 %90
    %v92 = vadd.f32 %v51, %v52
    %93 = vadd.xlane.f32.xlu0 %v92
    %v94 = vpop.xlane.xlu0 %93
    %v95 = vadd.f32 %v53, %v54
    %96 = vadd.xlane.f32.xlu0 %v95
    %v97 = vpop.xlane.xlu0 %96
    %v98 = vadd.f32 %v55, %v56
    %99 = vadd.xlane.f32.xlu0 %v98
    %v100 = vpop.xlane.xlu0 %99
    %v101 = vadd.f32 %v57, %v58
    %102 = vadd.xlane.f32.xlu0 %v101
    %v103 = vpop.xlane.xlu0 %102
    %v104 = vadd.f32 %v59, %v60
    %105 = vadd.xlane.f32.xlu0 %v104
    %v106 = vpop.xlane.xlu0 %105
    %v107 = vadd.f32 %v61, %v62
    %108 = vadd.xlane.f32.xlu0 %v107
    %v109 = vpop.xlane.xlu0 %108
    %v110 = vadd.f32 %v63, %v64
    %111 = vadd.xlane.f32.xlu0 %v110
    %v112 = vpop.xlane.xlu0 %111
    %v113 = vadd.f32 %v65, %v66
    %114 = vadd.xlane.f32.xlu0 %v113
    %v115 = vpop.xlane.xlu0 %114
    %v132 = vlaneseq
    %v133 = vand.u32 %v132, 127
    %v134 = vlaneseq
    %v135 = vshrl.u32 %v134, 7
    %v136 = vsub.s32 %v133, %v135
    %v137 = vrot.slane %v70, %v136
    %v138 = vadd.s32 %v133, 4294967288
    %v139 = vlaneseq
    %v140 = vshrl.u32 %v139, 7
    %v141 = vsub.s32 %v138, %v140
    %v142 = vrot.slane %v73, %v141
    %vm143 = vcmask 130112
    %v144 = vsel %vm143, %v142, %v137
    %v145 = vadd.s32 %v133, 4294967280
    %v146 = vlaneseq
    %v147 = vshrl.u32 %v146, 7
    %v148 = vsub.s32 %v145, %v147
    %v149 = vrot.slane %v76, %v148
    %vm150 = vcmask 195712
    %v151 = vsel %vm150, %v149, %v144
    %v152 = vadd.s32 %v133, 4294967272
    %v153 = vlaneseq
    %v154 = vshrl.u32 %v153, 7
    %v155 = vsub.s32 %v152, %v154
    %v156 = vrot.slane %v79, %v155
    %vm157 = vcmask 261312
    %v158 = vsel %vm157, %v156, %v151
    %v159 = vadd.s32 %v133, 4294967264
    %v160 = vlaneseq
    %v161 = vshrl.u32 %v160, 7
    %v162 = vsub.s32 %v159, %v161
    %v163 = vrot.slane %v82, %v162
    %vm164 = vcmask 326912
    %v165 = vsel %vm164, %v163, %v158
    %v166 = vadd.s32 %v133, 4294967256
    %v167 = vlaneseq
    %v168 = vshrl.u32 %v167, 7
    %v169 = vsub.s32 %v166, %v168
    %v170 = vrot.slane %v85, %v169
    %vm171 = vcmask 392512
    %v172 = vsel %vm171, %v170, %v165
    %v173 = vadd.s32 %v133, 4294967248
    %v174 = vlaneseq
    %v175 = vshrl.u32 %v174, 7
    %v176 = vsub.s32 %v173, %v175
    %v177 = vrot.slane %v88, %v176
    %vm178 = vcmask 458112
    %v179 = vsel %vm178, %v177, %v172
    %v180 = vadd.s32 %v133, 4294967240
    %v181 = vlaneseq
    %v182 = vshrl.u32 %v181, 7
    %v183 = vsub.s32 %v180, %v182
    %v184 = vrot.slane %v91, %v183
    %vm185 = vcmask 523712
    %v186 = vsel %vm185, %v184, %v179
    %v187 = vlaneseq
    %v188 = vshrl.u32 %v187, 7
    %v189 = vsub.s32 %v133, %v188
    %v190 = vrot.slane %v94, %v189
    %v191 = vlaneseq
    %v192 = vshrl.u32 %v191, 7
    %v193 = vsub.s32 %v138, %v192
    %v194 = vrot.slane %v97, %v193
    %v195 = vsel %vm143, %v194, %v190
    %v196 = vlaneseq
    %v197 = vshrl.u32 %v196, 7
    %v198 = vsub.s32 %v145, %v197
    %v199 = vrot.slane %v100, %v198
    %v200 = vsel %vm150, %v199, %v195
    %v201 = vlaneseq
    %v202 = vshrl.u32 %v201, 7
    %v203 = vsub.s32 %v152, %v202
    %v204 = vrot.slane %v103, %v203
    %v205 = vsel %vm157, %v204, %v200
    %v206 = vlaneseq
    %v207 = vshrl.u32 %v206, 7
    %v208 = vsub.s32 %v159, %v207
    %v209 = vrot.slane %v106, %v208
    %v210 = vsel %vm164, %v209, %v205
    %v211 = vlaneseq
    %v212 = vshrl.u32 %v211, 7
    %v213 = vsub.s32 %v166, %v212
    %v214 = vrot.slane %v109, %v213
    %v215 = vsel %vm171, %v214, %v210
    %v216 = vlaneseq
    %v217 = vshrl.u32 %v216, 7
    %v218 = vsub.s32 %v173, %v217
    %v219 = vrot.slane %v112, %v218
    %v220 = vsel %vm178, %v219, %v215
    %v221 = vlaneseq
    %v222 = vshrl.u32 %v221, 7
    %v223 = vsub.s32 %v180, %v222
    %v224 = vrot.slane %v115, %v223
    %v225 = vsel %vm185, %v224, %v220
    %vm226 = vcmask 1041409
    %v227 = vsel %vm226, %v225, %v186
    %v229 = vadd.f32 %v67, %v227
    %vm230 = vcmask 517120
    %231 = vst.msk [vmem:[#allocation2] sm:$0x3] %vm230, %v229
    // Predicated region
    $region22: #{tpu_custom_call.1} parent=1 // pred_check
      %p232 = pneg %p29
    $region23: #{tpu_custom_call.1} parent=1 // pred_check_branch
      %234 = sbr.rel (%p232) target = $region25
    $region24: #{tpu_custom_call.1} parent=1 // pred_region
      %v235 = vld [vmem:[#allocation2] sm:$0x3]
      %v236 = vmul.f32 %v235, 0.00390625
      %v237 = vld [vmem:[%s1] sm:$0xff]
      %v238 = vld [vmem:[%s1 + $0x8] sm:$0xff]
      %v239 = vld [vmem:[%s1 + $0x10] sm:$0xff]
      %v240 = vld [vmem:[%s1 + $0x18] sm:$0xff]
      %v241 = vld [vmem:[%s1 + $0x20] sm:$0xff]
      %v242 = vld [vmem:[%s1 + $0x28] sm:$0xff]
      %v243 = vld [vmem:[%s1 + $0x30] sm:$0xff]
      %v244 = vld [vmem:[%s1 + $0x38] sm:$0xff]
      %vm245 = vcmask 523264
      %v247 = vsel %vm245, %v236, 0
      %249 = vmatprep.subr.mxu0 0.0
      %250 = vmatpush1.msra.mxu0 %v237
      %251 = vmatprep.subr.mxu0 0.0
      %252 = vmatpush1.msra.mxu0 %v238
      %253 = vmatprep.subr.mxu0 0.0
      %254 = vmatpush1.msra.mxu0 %v239
      %255 = vmatprep.subr.mxu0 0.0
      %256 = vmatpush1.msra.mxu0 %v240
      %257 = vmatprep.subr.mxu0 0.0
      %258 = vmatpush1.msra.mxu0 %v241
      %259 = vmatprep.subr.mxu0 0.0
      %260 = vmatpush1.msra.mxu0 %v242
      %261 = vmatprep.subr.mxu0 0.0
      %262 = vmatpush1.msra.mxu0 %v243
      %263 = vmatprep.subr.mxu0 0.0
      %264 = vmatpush1.msra.mxu0 %v244
      %265 = vmatprep.subr.mxu0 0.0
      %266 = vmatpush1.msra.mxu0 0.0
      %267 = vmatprep.subr.mxu0 0.0
      %268 = vmatpush1.msra.mxu0 0.0
      %269 = vmatprep.subr.mxu0 0.0
      %270 = vmatpush1.msra.mxu0 0.0
      %271 = vmatprep.subr.mxu0 0.0
      %272 = vmatpush1.msra.mxu0 0.0
      %273 = vmatprep.subr.mxu0 0.0
      %274 = vmatpush1.msra.mxu0 0.0
      %275 = vmatprep.subr.mxu0 0.0
      %276 = vmatpush1.msra.mxu0 0.0
      %277 = vmatprep.subr.mxu0 0.0
      %278 = vmatpush1.msra.mxu0 0.0
      %279 = vmatprep.subr.mxu0 0.0
      %280 = vmatpush1.msra.mxu0 0.0
      %281 = vmatprep.subr.mxu0 0.0
      %282 = vmatpush1.msra.mxu0 0.0
      %283 = vmatprep.subr.mxu0 0.0
      %284 = vmatpush1.msra.mxu0 0.0
      %285 = vmatprep.subr.mxu0 0.0
      %286 = vmatpush1.msra.mxu0 0.0
      %287 = vmatprep.subr.mxu0 0.0
      %288 = vmatpush1.msra.mxu0 0.0
      %289 = vmatprep.subr.mxu0 0.0
      %290 = vmatpush1.msra.mxu0 0.0
      %291 = vmatprep.subr.mxu0 0.0
      %292 = vmatpush1.msra.mxu0 0.0
      %293 = vmatprep.subr.mxu0 0.0
      %294 = vmatpush1.msra.mxu0 0.0
      %295 = vmatprep.subr.mxu0 0.0
      %296 = vmatpush1.msra.mxu0 0.0
      %297 = vmatprep.subr.mxu0 0.0
      %298 = vmatpush1.msra.mxu0 0.0
      %299 = vmatprep.subr.mxu0 0.0
      %300 = vmatpush1.msra.mxu0 0.0
      %301 = vmatprep.subr.mxu0 0.0
      %302 = vmatpush1.msra.mxu0 0.0
      %303 = vmatprep.subr.mxu0 0.0
      %304 = vmatpush1.msra.mxu0 0.0
      %305 = vmatprep.subr.mxu0 0.0
      %306 = vmatpush1.msra.mxu0 0.0
      %307 = vmatprep.subr.mxu0 0.0
      %308 = vmatpush1.msra.mxu0 0.0
      %309 = vmatprep.subr.mxu0 0.0
      %310 = vmatpush1.msra.mxu0 0.0
      %311 = vmatprep.subr.mxu0 0.0
      %312 = vmatpush1.msra.mxu0 0.0
      %313 = vmatprep.mubr.f32.mxu0 0.0
      %314 = vmatmul.mubr.f32.gmra.mrb[0].mxu0 %v247
      %v315 = vpop.f32.mrb[0].mxu0
      %v316 = vadd.f32 0.0, %v315
      %v317 = vpop.f32.mrb[0].mxu0
      %318 = vdwg.mxu0
      %v319 = vmax.f32 %v316, 0.0
      %v320 = vld [vmem:[%s2] sm:$0xf]
      %vm321 = vcmask 31744
      %v323 = vsel %vm321, %v319, 0
      %vm325 = vcmask 1043456
      %v327 = vsel %vm325, %v320, 0
      %329 = vmatprep.subr.mxu0 0.0
      %330 = vmatpush1.msra.mxu0 %v327
      %331 = vmatprep.subr.mxu0 0.0
      %332 = vmatpush1.msra.mxu0 0.0
      %333 = vmatprep.subr.mxu0 0.0
      %334 = vmatpush1.msra.mxu0 0.0
      %335 = vmatprep.subr.mxu0 0.0
      %336 = vmatpush1.msra.mxu0 0.0
      %337 = vmatprep.subr.mxu0 0.0
      %338 = vmatpush1.msra.mxu0 0.0
      %339 = vmatprep.subr.mxu0 0.0
      %340 = vmatpush1.msra.mxu0 0.0
      %341 = vmatprep.subr.mxu0 0.0
      %342 = vmatpush1.msra.mxu0 0.0
      %343 = vmatprep.subr.mxu0 0.0
      %344 = vmatpush1.msra.mxu0 0.0
      %345 = vmatprep.subr.mxu0 0.0
      %346 = vmatpush1.msra.mxu0 0.0
      %347 = vmatprep.subr.mxu0 0.0
      %348 = vmatpush1.msra.mxu0 0.0
      %349 = vmatprep.subr.mxu0 0.0
      %350 = vmatpush1.msra.mxu0 0.0
      %351 = vmatprep.subr.mxu0 0.0
      %352 = vmatpush1.msra.mxu0 0.0
      %353 = vmatprep.subr.mxu0 0.0
      %354 = vmatpush1.msra.mxu0 0.0
      %355 = vmatprep.subr.mxu0 0.0
      %356 = vmatpush1.msra.mxu0 0.0
      %357 = vmatprep.subr.mxu0 0.0
      %358 = vmatpush1.msra.mxu0 0.0
      %359 = vmatprep.subr.mxu0 0.0
      %360 = vmatpush1.msra.mxu0 0.0
      %361 = vmatprep.subr.mxu0 0.0
      %362 = vmatpush1.msra.mxu0 0.0
      %363 = vmatprep.subr.mxu0 0.0
      %364 = vmatpush1.msra.mxu0 0.0
      %365 = vmatprep.subr.mxu0 0.0
      %366 = vmatpush1.msra.mxu0 0.0
      %367 = vmatprep.subr.mxu0 0.0
      %368 = vmatpush1.msra.mxu0 0.0
      %369 = vmatprep.subr.mxu0 0.0
      %370 = vmatpush1.msra.mxu0 0.0
      %371 = vmatprep.subr.mxu0 0.0
      %372 = vmatpush1.msra.mxu0 0.0
      %373 = vmatprep.subr.mxu0 0.0
      %374 = vmatpush1.msra.mxu0 0.0
      %375 = vmatprep.subr.mxu0 0.0
      %376 = vmatpush1.msra.mxu0 0.0
      %377 = vmatprep.subr.mxu0 0.0
      %378 = vmatpush1.msra.mxu0 0.0
      %379 = vmatprep.subr.mxu0 0.0
      %380 = vmatpush1.msra.mxu0 0.0
      %381 = vmatprep.subr.mxu0 0.0
      %382 = vmatpush1.msra.mxu0 0.0
      %383 = vmatprep.subr.mxu0 0.0
      %384 = vmatpush1.msra.mxu0 0.0
      %385 = vmatprep.subr.mxu0 0.0
      %386 = vmatpush1.msra.mxu0 0.0
      %387 = vmatprep.subr.mxu0 0.0
      %388 = vmatpush1.msra.mxu0 0.0
      %389 = vmatprep.subr.mxu0 0.0
      %390 = vmatpush1.msra.mxu0 0.0
      %391 = vmatprep.subr.mxu0 0.0
      %392 = vmatpush1.msra.mxu0 0.0
      %393 = vmatprep.mubr.f32.mxu0 0.0
      %394 = vmatmul.mubr.f32.gmra.mrb[0].mxu0 %v323
      %v395 = vpop.f32.mrb[0].mxu0
      %v396 = vadd.f32 0.0, %v395
      %v397 = vpop.f32.mrb[0].mxu0
      %398 = vdwg.mxu0
      %vm399 = vcmask 9216
      %v400 = vsel %vm399, %v396, -inf
      %401 = vmax.xlane.f32.xlu0 %v400
      %v402 = vpop.xlane.xlu0 %401
      %v403 = vsub.f32 %v396, %v402
      %v404 = vmul.f32 %v403, 1.442695
      %v405 = vpow.pop %v404
      %v406 = vsel %vm399, %v405, 0.0
      %407 = vadd.xlane.f32.xlu0 %v406
      %v408 = vpop.xlane.xlu0 %407
      %v409 = vrcp.pop %v408
      %v410 = vmul.f32 %v405, %v409
      %411 = vst.msk [vmem:[#allocation6] sm:$0x3] %vm399, %v410
    $region25: #{tpu_custom_call.1} parent=1 // pred_fallthru
      _
    // Predicated region
    $region26: #{tpu_custom_call.1} parent=1 // pred_check
      _
    $region27: #{tpu_custom_call.1} parent=1 // pred_check_branch
      %413 = sbr.rel (0) target = $region29
    $region28: #{tpu_custom_call.1} parent=1 // pred_region
      %s415 = ssub.s32 32, 32
      %416 = vsyncadd [#allocation5], %s415
      %s418 = sshll.u32 [#allocation6], 4
      %s419 = int_to_ptr.vmem [resolvable:$true] %s418
      %421 = dma.vmem_to_hbm [thread:$0]  %s419, 32, %s3, [#allocation5]
    $region29: #{tpu_custom_call.1} parent=1 // pred_fallthru
      _
    // Predicated region
    $region30: #{tpu_custom_call.1} parent=1 // pred_check
      _
    $region31: #{tpu_custom_call.1} parent=1 // pred_check_branch
      %423 = sbr.rel (0) target = $region33
    $region32: #{tpu_custom_call.1} parent=1 // pred_region
      %424 = dma.done [#allocation5], 32
    $region33: #{tpu_custom_call.1} parent=1 // pred_fallthru
      _
    %425 = vsyncpa [#allocation4], 1
    %426 = vsyncpa [#allocation5], 1

</llo_original>
